<compile_context>
chip_gen: v7x
topology: tpu7x:2x2x1
jax: 0.10.0
libtpu: 0.0.40
codegen_flags: <defaults>
</compile_context>

<pallas_src>
import functools

import jax
import jax.numpy as jnp
from jax.experimental import pallas as pl
from jax.experimental.pallas import tpu as pltpu


# ------------------------------ static sizes --------------------------------

N_NODES = 16     # graph nodes
F_IN = 4         # input node feature dim (nn.Linear(4, 32))
HIDDEN = 32      # hidden width
N_GCN = 6        # conv1, conv2, conv3, conv11, conv21, conv31

# params-slab row offsets (8-row aligned regions)
_FC1_W = 0                               # rows [0, 4)    : [4, 32]
_FC1_B = 8                               # row 8          : [1, 32]
_GCN_W = 16                              # rows 16+32i .. : [32, 32] each
_GCN_B = _GCN_W + 32 * N_GCN             # = 208; rows 208+8i : [1, 32] each
_FC2_WT = _GCN_B + 8 * N_GCN             # = 256; row 256 : fc2_w transposed [1, 32]
_FC2_B = _FC2_WT + 8                     # = 264; [264, 0]: fc2 bias scalar
_PARAM_ROWS = _FC2_B + 8                 # = 272


# ----------------------------- fused Pallas kernel --------------------------

def _net_kernel(x_ref, graph_ref, params_ref, out_ref, *, m):
    """Whole forward pass on VMEM-resident tiles.

    x_ref      : [N, 4]              node features (per-call input)
    graph_ref  : [N + M, N]          rows 0:N = Ahat, rows N:N+M = onehot @ Ahat
    params_ref : [_PARAM_ROWS, 32]   packed weights/biases (see offsets above)
    out_ref    : [M, 1]
    """
    ahat = graph_ref[0:N_NODES, :]                     # [N, N]
    sel_ahat = graph_ref[N_NODES:N_NODES + m, :]       # [M, N]

    # fc1 + relu
    fc1_w = params_ref[_FC1_W:_FC1_W + F_IN, :]        # [4, 32]
    fc1_b = params_ref[_FC1_B:_FC1_B + 1, :]           # [1, 32]
    h = jnp.dot(x_ref[...], fc1_w, preferred_element_type=jnp.float32)
    h = jnp.maximum(h + fc1_b, 0.0)

    # conv1, conv2, conv3, conv11, conv21 (each followed by relu)
    for i in range(N_GCN - 1):
        w = params_ref[_GCN_W + 32 * i:_GCN_W + 32 * (i + 1), :]   # [32, 32]
        b = params_ref[_GCN_B + 8 * i:_GCN_B + 8 * i + 1, :]       # [1, 32]
        xw = jnp.dot(h, w, preferred_element_type=jnp.float32)
        h = jnp.maximum(
            jnp.dot(ahat, xw, preferred_element_type=jnp.float32) + b, 0.0)

    # conv31 with the mask gather folded into the aggregation:
    #   (Ahat @ (h @ W6) + b6)[mask] == sel_ahat @ (h @ W6) + b6
    w6 = params_ref[_GCN_W + 32 * (N_GCN - 1):_GCN_W + 32 * N_GCN, :]
    b6 = params_ref[_GCN_B + 8 * (N_GCN - 1):_GCN_B + 8 * (N_GCN - 1) + 1, :]
    xw6 = jnp.dot(h, w6, preferred_element_type=jnp.float32)
    hm = jnp.dot(sel_ahat, xw6, preferred_element_type=jnp.float32) + b6  # [M, 32]

    # relu + fc2 (fc2 weight stored transposed as a row -> mul + lane reduce)
    hm = jnp.maximum(hm, 0.0)
    fc2_wt = params_ref[_FC2_WT:_FC2_WT + 1, :]        # [1, 32]
    fc2_b = params_ref[_FC2_B:_FC2_B + 1, 0:1]         # [1, 1]
    out_ref[...] = jnp.sum(hm * fc2_wt, axis=1, keepdims=True) + fc2_b


_VMEM_SPEC = pl.BlockSpec(memory_space=pltpu.MemorySpace.VMEM)


def net_forward(x, graph_slab, param_slab):
    """Single fused pallas_call for the whole network."""
    m = graph_slab.shape[0] - N_NODES
    return pl.pallas_call(
        functools.partial(_net_kernel, m=m),
        out_shape=jax.ShapeDtypeStruct((m, 1), jnp.float32),
        in_specs=[_VMEM_SPEC] * 3,
        out_specs=_VMEM_SPEC,
    )(x, graph_slab, param_slab)


# ------------------------------- JAX glue -----------------------------------
# All graph / parameter packing is hoisted out of the hot path: for a static
# graph and fixed weights these run exactly once, not per forward call.

def gcn_norm_adj(edge_index, num_nodes):
    """Dense normalized adjacency: D^-1/2 (A + I) D^-1/2.

    Matches PyG GCNConv's default gcn_norm with add_remaining_self_loops:
    existing self-loop edges are dropped and the diagonal is set to 1.
    Duplicate directed edges accumulate weight > 1 (scatter-add semantics).
    """
    src = edge_index[0]
    dst = edge_index[1]
    not_self = (src != dst).astype(jnp.float32)
    a = jnp.zeros((num_nodes, num_nodes), jnp.float32)
    a = a.at[dst, src].add(not_self)                 # message flows src -> dst
    a = a + jnp.eye(num_nodes, dtype=jnp.float32)    # remaining self-loops = 1
    deg = a.sum(axis=1)
    dinv = jnp.where(deg > 0.0, 1.0 / jnp.sqrt(deg), 0.0)
    return dinv[:, None] * a * dinv[None, :]


def pack_graph(edge_index, mask_index, num_nodes):
    """[N + M, N] slab: rows 0:N = Ahat, rows N:N+M = onehot(mask) @ Ahat."""
    ahat = gcn_norm_adj(edge_index, num_nodes)
    onehot = (mask_index[:, None] == jnp.arange(num_nodes)[None, :]).astype(
        jnp.float32)
    sel_ahat = onehot @ ahat
    return jnp.concatenate([ahat, sel_ahat], axis=0)


def pack_params(params):
    """Pack all weights/biases into one [_PARAM_ROWS, 32] f32 slab."""
    slab = jnp.zeros((_PARAM_ROWS, HIDDEN), jnp.float32)
    slab = slab.at[_FC1_W:_FC1_W + F_IN].set(params["fc1_w"])
    slab = slab.at[_FC1_B].set(params["fc1_b"][0])
    for i in range(N_GCN):
        slab = slab.at[_GCN_W + 32 * i:_GCN_W + 32 * (i + 1)].set(
            params["gcn_w"][i])
        slab = slab.at[_GCN_B + 8 * i].set(params["gcn_b"][i, 0])
    slab = slab.at[_FC2_WT].set(params["fc2_w"][:, 0])
    slab = slab.at[_FC2_B, 0].set(params["fc2_b"][0, 0])
    return slab


def init_params(key):
    """Deterministic synthetic parameters matching the module's shapes."""
    ks = jax.random.split(key, 16)
    p = {}
    p["fc1_w"] = 0.1 * jax.random.normal(ks[0], (4, 32), jnp.float32)
    p["fc1_b"] = 0.1 * jax.random.normal(ks[1], (1, 32), jnp.float32)
    gcn_w, gcn_b = [], []
    for i in range(N_GCN):
        gcn_w.append(0.1 * jax.random.normal(ks[2 + 2 * i], (32, 32),
                                             jnp.float32))
        gcn_b.append(0.1 * jax.random.normal(ks[3 + 2 * i], (1, 32),
                                             jnp.float32))
    p["gcn_w"] = jnp.stack(gcn_w, axis=0)    # [6, 32, 32]
    p["gcn_b"] = jnp.stack(gcn_b, axis=0)    # [6, 1, 32]
    p["fc2_w"] = 0.1 * jax.random.normal(ks[14], (32, 1), jnp.float32)
    p["fc2_b"] = 0.1 * jax.random.normal(ks[15], (1, 1), jnp.float32)
    return p


def net_reference(params, x, edge_index, mask_index, num_nodes):
    """Pure-JAX reference of the module's forward (for correctness check)."""
    ahat = gcn_norm_adj(edge_index, num_nodes)
    h = jnp.maximum(x @ params["fc1_w"] + params["fc1_b"], 0.0)
    for i in range(N_GCN):
        h = ahat @ (h @ params["gcn_w"][i]) + params["gcn_b"][i]
        if i < N_GCN - 1:
            h = jnp.maximum(h, 0.0)
    hm = jnp.maximum(h[mask_index], 0.0)
    return hm @ params["fc2_w"] + params["fc2_b"]


# --------------------------------- main --------------------------------------

if __name__ == "__main__":
    key = jax.random.PRNGKey(0)
    k_param, k_x, k_edge = jax.random.split(key, 3)

    E = 40          # number of directed edges

    params = init_params(k_param)

    x = jax.random.normal(k_x, (N_NODES, F_IN), jnp.float32)
    edge_index = jax.random.randint(k_edge, (2, E), 0, N_NODES, dtype=jnp.int32)
    mask_index = jnp.array([0, 3, 5, 7], dtype=jnp.int32)

    # One-time static preprocessing (outside the hot forward path).
    graph_slab = pack_graph(edge_index, mask_index, N_NODES)   # [20, 16]
    param_slab = pack_params(params)                           # [272, 32]

    fwd = jax.jit(net_forward)
    out = fwd(x, graph_slab, param_slab)
    jax.block_until_ready(out)

    assert out.shape == (mask_index.shape[0], 1)

    ref = net_reference(params, x, edge_index, mask_index, N_NODES)
    assert jnp.allclose(out, ref, atol=1e-3, rtol=1e-3), (out, ref)

    print("KERNEL_OK")
</pallas_src>

<mosaic_0001>
module attributes {stable_mosaic.version = 11 : i64} {
  func.func @_net_kernel(%arg0: memref<16x4xf32, #tpu.memory_space<vmem>>, %arg1: memref<20x16xf32, #tpu.memory_space<vmem>>, %arg2: memref<272x32xf32, #tpu.memory_space<vmem>>, %arg3: memref<4x1xf32, #tpu.memory_space<vmem>>) attributes {dimension_semantics = [], scalar_prefetch = 0 : i64, scratch_operands = 0 : i64, tpu.core_type = #tpu.core_type<tc>} {
    %c0 = arith.constant 0 : index
    %c0_0 = arith.constant 0 : index
    %0 = vector.load %arg1[%c0, %c0_0] : memref<20x16xf32, #tpu.memory_space<vmem>>, vector<16x16xf32>
    %c16 = arith.constant 16 : index
    %c0_1 = arith.constant 0 : index
    %1 = vector.load %arg1[%c16, %c0_1] : memref<20x16xf32, #tpu.memory_space<vmem>>, vector<4x16xf32>
    %c0_2 = arith.constant 0 : index
    %c0_3 = arith.constant 0 : index
    %2 = vector.load %arg2[%c0_2, %c0_3] : memref<272x32xf32, #tpu.memory_space<vmem>>, vector<4x32xf32>
    %c8 = arith.constant 8 : index
    %c0_4 = arith.constant 0 : index
    %3 = vector.load %arg2[%c8, %c0_4] : memref<272x32xf32, #tpu.memory_space<vmem>>, vector<1x32xf32>
    %c0_5 = arith.constant 0 : index
    %c0_6 = arith.constant 0 : index
    %4 = vector.load %arg0[%c0_5, %c0_6] : memref<16x4xf32, #tpu.memory_space<vmem>>, vector<16x4xf32>
    %cst = arith.constant dense<0.000000e+00> : vector<16x32xf32>
    %5 = tpu.matmul %4, %2, %cst {dimension_numbers = #tpu.dot_dimension_numbers<[1], [0], [0], [1], [0, 0, 1, 1], [], []>} : vector<16x4xf32>, vector<4x32xf32>, vector<16x32xf32> -> vector<16x32xf32>
    %6 = vector.broadcast %3 : vector<1x32xf32> to vector<16x32xf32>
    %7 = arith.addf %5, %6 : vector<16x32xf32>
    %cst_7 = arith.constant 0.000000e+00 : f32
    %8 = vector.broadcast %cst_7 : f32 to vector<16x32xf32>
    %9 = arith.maximumf %7, %8 : vector<16x32xf32>
    %c16_8 = arith.constant 16 : index
    %c0_9 = arith.constant 0 : index
    %10 = vector.load %arg2[%c16_8, %c0_9] : memref<272x32xf32, #tpu.memory_space<vmem>>, vector<32x32xf32>
    %c208 = arith.constant 208 : index
    %c0_10 = arith.constant 0 : index
    %11 = vector.load %arg2[%c208, %c0_10] : memref<272x32xf32, #tpu.memory_space<vmem>>, vector<1x32xf32>
    %cst_11 = arith.constant dense<0.000000e+00> : vector<16x32xf32>
    %12 = tpu.matmul %9, %10, %cst_11 {dimension_numbers = #tpu.dot_dimension_numbers<[1], [0], [0], [1], [0, 0, 1, 1], [], []>} : vector<16x32xf32>, vector<32x32xf32>, vector<16x32xf32> -> vector<16x32xf32>
    %cst_12 = arith.constant dense<0.000000e+00> : vector<16x32xf32>
    %13 = tpu.matmul %0, %12, %cst_12 {dimension_numbers = #tpu.dot_dimension_numbers<[1], [0], [0], [1], [0, 0, 1, 1], [], []>} : vector<16x16xf32>, vector<16x32xf32>, vector<16x32xf32> -> vector<16x32xf32>
    %14 = vector.broadcast %11 : vector<1x32xf32> to vector<16x32xf32>
    %15 = arith.addf %13, %14 : vector<16x32xf32>
    %cst_13 = arith.constant 0.000000e+00 : f32
    %16 = vector.broadcast %cst_13 : f32 to vector<16x32xf32>
    %17 = arith.maximumf %15, %16 : vector<16x32xf32>
    %c48 = arith.constant 48 : index
    %c0_14 = arith.constant 0 : index
    %18 = vector.load %arg2[%c48, %c0_14] : memref<272x32xf32, #tpu.memory_space<vmem>>, vector<32x32xf32>
    %c216 = arith.constant 216 : index
    %c0_15 = arith.constant 0 : index
    %19 = vector.load %arg2[%c216, %c0_15] : memref<272x32xf32, #tpu.memory_space<vmem>>, vector<1x32xf32>
    %cst_16 = arith.constant dense<0.000000e+00> : vector<16x32xf32>
    %20 = tpu.matmul %17, %18, %cst_16 {dimension_numbers = #tpu.dot_dimension_numbers<[1], [0], [0], [1], [0, 0, 1, 1], [], []>} : vector<16x32xf32>, vector<32x32xf32>, vector<16x32xf32> -> vector<16x32xf32>
    %cst_17 = arith.constant dense<0.000000e+00> : vector<16x32xf32>
    %21 = tpu.matmul %0, %20, %cst_17 {dimension_numbers = #tpu.dot_dimension_numbers<[1], [0], [0], [1], [0, 0, 1, 1], [], []>} : vector<16x16xf32>, vector<16x32xf32>, vector<16x32xf32> -> vector<16x32xf32>
    %22 = vector.broadcast %19 : vector<1x32xf32> to vector<16x32xf32>
    %23 = arith.addf %21, %22 : vector<16x32xf32>
    %cst_18 = arith.constant 0.000000e+00 : f32
    %24 = vector.broadcast %cst_18 : f32 to vector<16x32xf32>
    %25 = arith.maximumf %23, %24 : vector<16x32xf32>
    %c80 = arith.constant 80 : index
    %c0_19 = arith.constant 0 : index
    %26 = vector.load %arg2[%c80, %c0_19] : memref<272x32xf32, #tpu.memory_space<vmem>>, vector<32x32xf32>
    %c224 = arith.constant 224 : index
    %c0_20 = arith.constant 0 : index
    %27 = vector.load %arg2[%c224, %c0_20] : memref<272x32xf32, #tpu.memory_space<vmem>>, vector<1x32xf32>
    %cst_21 = arith.constant dense<0.000000e+00> : vector<16x32xf32>
    %28 = tpu.matmul %25, %26, %cst_21 {dimension_numbers = #tpu.dot_dimension_numbers<[1], [0], [0], [1], [0, 0, 1, 1], [], []>} : vector<16x32xf32>, vector<32x32xf32>, vector<16x32xf32> -> vector<16x32xf32>
    %cst_22 = arith.constant dense<0.000000e+00> : vector<16x32xf32>
    %29 = tpu.matmul %0, %28, %cst_22 {dimension_numbers = #tpu.dot_dimension_numbers<[1], [0], [0], [1], [0, 0, 1, 1], [], []>} : vector<16x16xf32>, vector<16x32xf32>, vector<16x32xf32> -> vector<16x32xf32>
    %30 = vector.broadcast %27 : vector<1x32xf32> to vector<16x32xf32>
    %31 = arith.addf %29, %30 : vector<16x32xf32>
    %cst_23 = arith.constant 0.000000e+00 : f32
    %32 = vector.broadcast %cst_23 : f32 to vector<16x32xf32>
    %33 = arith.maximumf %31, %32 : vector<16x32xf32>
    %c112 = arith.constant 112 : index
    %c0_24 = arith.constant 0 : index
    %34 = vector.load %arg2[%c112, %c0_24] : memref<272x32xf32, #tpu.memory_space<vmem>>, vector<32x32xf32>
    %c232 = arith.constant 232 : index
    %c0_25 = arith.constant 0 : index
    %35 = vector.load %arg2[%c232, %c0_25] : memref<272x32xf32, #tpu.memory_space<vmem>>, vector<1x32xf32>
    %cst_26 = arith.constant dense<0.000000e+00> : vector<16x32xf32>
    %36 = tpu.matmul %33, %34, %cst_26 {dimension_numbers = #tpu.dot_dimension_numbers<[1], [0], [0], [1], [0, 0, 1, 1], [], []>} : vector<16x32xf32>, vector<32x32xf32>, vector<16x32xf32> -> vector<16x32xf32>
    %cst_27 = arith.constant dense<0.000000e+00> : vector<16x32xf32>
    %37 = tpu.matmul %0, %36, %cst_27 {dimension_numbers = #tpu.dot_dimension_numbers<[1], [0], [0], [1], [0, 0, 1, 1], [], []>} : vector<16x16xf32>, vector<16x32xf32>, vector<16x32xf32> -> vector<16x32xf32>
    %38 = vector.broadcast %35 : vector<1x32xf32> to vector<16x32xf32>
    %39 = arith.addf %37, %38 : vector<16x32xf32>
    %cst_28 = arith.constant 0.000000e+00 : f32
    %40 = vector.broadcast %cst_28 : f32 to vector<16x32xf32>
    %41 = arith.maximumf %39, %40 : vector<16x32xf32>
    %c144 = arith.constant 144 : index
    %c0_29 = arith.constant 0 : index
    %42 = vector.load %arg2[%c144, %c0_29] : memref<272x32xf32, #tpu.memory_space<vmem>>, vector<32x32xf32>
    %c240 = arith.constant 240 : index
    %c0_30 = arith.constant 0 : index
    %43 = vector.load %arg2[%c240, %c0_30] : memref<272x32xf32, #tpu.memory_space<vmem>>, vector<1x32xf32>
    %cst_31 = arith.constant dense<0.000000e+00> : vector<16x32xf32>
    %44 = tpu.matmul %41, %42, %cst_31 {dimension_numbers = #tpu.dot_dimension_numbers<[1], [0], [0], [1], [0, 0, 1, 1], [], []>} : vector<16x32xf32>, vector<32x32xf32>, vector<16x32xf32> -> vector<16x32xf32>
    %cst_32 = arith.constant dense<0.000000e+00> : vector<16x32xf32>
    %45 = tpu.matmul %0, %44, %cst_32 {dimension_numbers = #tpu.dot_dimension_numbers<[1], [0], [0], [1], [0, 0, 1, 1], [], []>} : vector<16x16xf32>, vector<16x32xf32>, vector<16x32xf32> -> vector<16x32xf32>
    %46 = vector.broadcast %43 : vector<1x32xf32> to vector<16x32xf32>
    %47 = arith.addf %45, %46 : vector<16x32xf32>
    %cst_33 = arith.constant 0.000000e+00 : f32
    %48 = vector.broadcast %cst_33 : f32 to vector<16x32xf32>
    %49 = arith.maximumf %47, %48 : vector<16x32xf32>
    %c176 = arith.constant 176 : index
    %c0_34 = arith.constant 0 : index
    %50 = vector.load %arg2[%c176, %c0_34] : memref<272x32xf32, #tpu.memory_space<vmem>>, vector<32x32xf32>
    %c248 = arith.constant 248 : index
    %c0_35 = arith.constant 0 : index
    %51 = vector.load %arg2[%c248, %c0_35] : memref<272x32xf32, #tpu.memory_space<vmem>>, vector<1x32xf32>
    %cst_36 = arith.constant dense<0.000000e+00> : vector<16x32xf32>
    %52 = tpu.matmul %49, %50, %cst_36 {dimension_numbers = #tpu.dot_dimension_numbers<[1], [0], [0], [1], [0, 0, 1, 1], [], []>} : vector<16x32xf32>, vector<32x32xf32>, vector<16x32xf32> -> vector<16x32xf32>
    %cst_37 = arith.constant dense<0.000000e+00> : vector<4x32xf32>
    %53 = tpu.matmul %1, %52, %cst_37 {dimension_numbers = #tpu.dot_dimension_numbers<[1], [0], [0], [1], [0, 0, 1, 1], [], []>} : vector<4x16xf32>, vector<16x32xf32>, vector<4x32xf32> -> vector<4x32xf32>
    %54 = vector.broadcast %51 : vector<1x32xf32> to vector<4x32xf32>
    %55 = arith.addf %53, %54 : vector<4x32xf32>
    %cst_38 = arith.constant 0.000000e+00 : f32
    %56 = vector.broadcast %cst_38 : f32 to vector<4x32xf32>
    %57 = arith.maximumf %55, %56 : vector<4x32xf32>
    %c256 = arith.constant 256 : index
    %c0_39 = arith.constant 0 : index
    %58 = vector.load %arg2[%c256, %c0_39] : memref<272x32xf32, #tpu.memory_space<vmem>>, vector<1x32xf32>
    %c264 = arith.constant 264 : index
    %c0_40 = arith.constant 0 : index
    %59 = vector.load %arg2[%c264, %c0_40] : memref<272x32xf32, #tpu.memory_space<vmem>>, vector<1x1xf32>
    %60 = vector.broadcast %58 : vector<1x32xf32> to vector<4x32xf32>
    %61 = arith.mulf %57, %60 : vector<4x32xf32>
    %cst_41 = arith.constant dense<0.000000e+00> : vector<4xf32>
    %62 = vector.multi_reduction <add>, %61, %cst_41 [1] : vector<4x32xf32> to vector<4xf32>
    %63 = vector.shape_cast %62 : vector<4xf32> to vector<4x1xf32>
    %64 = vector.broadcast %59 : vector<1x1xf32> to vector<4x1xf32>
    %65 = arith.addf %63, %64 : vector<4x1xf32>
    %c0_42 = arith.constant 0 : index
    %c0_43 = arith.constant 0 : index
    %66 = vector.load %arg3[%c0_42, %c0_43] : memref<4x1xf32, #tpu.memory_space<vmem>>, vector<4x1xf32>
    tpu.vector_store %arg3[%c0_42, %c0_43], %65 {strides = array<i32>} : memref<4x1xf32, #tpu.memory_space<vmem>>, vector<4x1xf32>,
    return
  }
}

</mosaic_0001>

<llo_original>
// kernel: net_forward.1
$region0: #{net_forward.1}
  #allocation0 [shape = 'u32[]', space=smem, size = 0x4, offset = 0x4, fixed_abs, tag = 'smem constant byte address 0x4 - core index']
  #allocation1 [shape = 'u32[144,128]{1,0:T(1,128)}', space=vmem, size = 0x12000, scoped, tag = 'internal scratch']
  %s0 = inlined_call_operand.vmem [shape: f32[16,4], index: 0, kind: input, shape index: {}]
  %s1 = inlined_call_operand.vmem [shape: f32[20,16], index: 1, kind: input, shape index: {}]
  %s2 = inlined_call_operand.vmem [shape: f32[272,32], index: 2, kind: input, shape index: {}]
  %s3 = inlined_call_operand.vmem [shape: f32[4,1], index: 3, kind: output, shape index: {}]
  %s4 = sld [smem:[#allocation0]]
  $region22: #{net_forward.1} parent=0
    _
  %s6 = ssub.s32 1, %s4
  %s7 = scalar_select 0, %s6, %s4
  // Predicated region
  $region2: #{net_forward.1} parent=0 // pred_check
    _
  $region3: #{net_forward.1} parent=0 // pred_check_branch
    %9 = sbr.rel (0) target = $region5
  $region4: #{net_forward.1} parent=0 // pred_region
    _
  $region5: #{net_forward.1} parent=0 // pred_fallthru
    _
  // Predicated region
  $region6: #{net_forward.1} parent=0 // pred_check
    _
  $region7: #{net_forward.1} parent=0 // pred_check_branch
    %11 = sbr.rel (0) target = $region9
  $region8: #{net_forward.1} parent=0 // pred_region
    _
  $region9: #{net_forward.1} parent=0 // pred_fallthru
    _
  // Predicated region
  $region10: #{net_forward.1} parent=0 // pred_check
    _
  $region11: #{net_forward.1} parent=0 // pred_check_branch
    %13 = sbr.rel (0) target = $region13
  $region12: #{net_forward.1} parent=0 // pred_region
    _
  $region13: #{net_forward.1} parent=0 // pred_fallthru
    _
  %v14 = vld [vmem:[%s1] sm:$0xff]
  %v15 = vld [vmem:[%s1 + $0x8] sm:$0xff]
  %v16 = vld [vmem:[%s1 + $0x10] sm:$0xf]
  %v17 = vld [vmem:[%s2] sm:$0xf]
  %v18 = vld [vmem:[%s2 + $0x8] sm:$0x1]
  %v19 = vld [vmem:[%s0] sm:$0xff]
  %v20 = vld [vmem:[%s0 + $0x8] sm:$0xff]
  %v21 = vlaneseq
  %v22 = vshrl.u32 %v21, 7
  %v23 = vsub.s32 0, %v22
  %v24 = vrot.slane %v18, %v23
  %vm25 = vcmask 31744
  %v27 = vsel %vm25, %v19, 0
  %v30 = vsel %vm25, %v20, 0
  %vm32 = vcmask 1043456
  %v34 = vsel %vm32, %v17, 0
  %36 = vmatprep.subr.mxu0 0.0
  %37 = vmatpush1.msra.mxu0 %v34
  %38 = vmatprep.subr.mxu0 0.0
  %39 = vmatpush1.msra.mxu0 0.0
  %40 = vmatprep.subr.mxu0 0.0
  %41 = vmatpush1.msra.mxu0 0.0
  %42 = vmatprep.subr.mxu0 0.0
  %43 = vmatpush1.msra.mxu0 0.0
  %44 = vmatprep.subr.mxu0 0.0
  %45 = vmatpush1.msra.mxu0 0.0
  %46 = vmatprep.subr.mxu0 0.0
  %47 = vmatpush1.msra.mxu0 0.0
  %48 = vmatprep.subr.mxu0 0.0
  %49 = vmatpush1.msra.mxu0 0.0
  %50 = vmatprep.subr.mxu0 0.0
  %51 = vmatpush1.msra.mxu0 0.0
  %52 = vmatprep.subr.mxu0 0.0
  %53 = vmatpush1.msra.mxu0 0.0
  %54 = vmatprep.subr.mxu0 0.0
  %55 = vmatpush1.msra.mxu0 0.0
  %56 = vmatprep.subr.mxu0 0.0
  %57 = vmatpush1.msra.mxu0 0.0
  %58 = vmatprep.subr.mxu0 0.0
  %59 = vmatpush1.msra.mxu0 0.0
  %60 = vmatprep.subr.mxu0 0.0
  %61 = vmatpush1.msra.mxu0 0.0
  %62 = vmatprep.subr.mxu0 0.0
  %63 = vmatpush1.msra.mxu0 0.0
  %64 = vmatprep.subr.mxu0 0.0
  %65 = vmatpush1.msra.mxu0 0.0
  %66 = vmatprep.subr.mxu0 0.0
  %67 = vmatpush1.msra.mxu0 0.0
  %68 = vmatprep.subr.mxu0 0.0
  %69 = vmatpush1.msra.mxu0 0.0
  %70 = vmatprep.subr.mxu0 0.0
  %71 = vmatpush1.msra.mxu0 0.0
  %72 = vmatprep.subr.mxu0 0.0
  %73 = vmatpush1.msra.mxu0 0.0
  %74 = vmatprep.subr.mxu0 0.0
  %75 = vmatpush1.msra.mxu0 0.0
  %76 = vmatprep.subr.mxu0 0.0
  %77 = vmatpush1.msra.mxu0 0.0
  %78 = vmatprep.subr.mxu0 0.0
  %79 = vmatpush1.msra.mxu0 0.0
  %80 = vmatprep.subr.mxu0 0.0
  %81 = vmatpush1.msra.mxu0 0.0
  %82 = vmatprep.subr.mxu0 0.0
  %83 = vmatpush1.msra.mxu0 0.0
  %84 = vmatprep.subr.mxu0 0.0
  %85 = vmatpush1.msra.mxu0 0.0
  %86 = vmatprep.subr.mxu0 0.0
  %87 = vmatpush1.msra.mxu0 0.0
  %88 = vmatprep.subr.mxu0 0.0
  %89 = vmatpush1.msra.mxu0 0.0
  %90 = vmatprep.subr.mxu0 0.0
  %91 = vmatpush1.msra.mxu0 0.0
  %92 = vmatprep.subr.mxu0 0.0
  %93 = vmatpush1.msra.mxu0 0.0
  %94 = vmatprep.subr.mxu0 0.0
  %95 = vmatpush1.msra.mxu0 0.0
  %96 = vmatprep.subr.mxu0 0.0
  %97 = vmatpush1.msra.mxu0 0.0
  %98 = vmatprep.subr.mxu0 0.0
  %99 = vmatpush1.msra.mxu0 0.0
  %100 = vmatprep.mubr.f32.mxu0 0.0
  %101 = vmatmul.mubr.f32.gmra.mrb[0].mxu0 %v27
  %v102 = vpop.f32.mrb[0].mxu0
  %v103 = vadd.f32 %v24, %v102
  %v104 = vpop.f32.mrb[0].mxu0
  %105 = vmatprep.mubr.f32.mxu0 0.0
  %106 = vmatmul.mubr.f32.gmra.mrb[0].mxu0 %v30
  %v107 = vpop.f32.mrb[0].mxu0
  %v108 = vadd.f32 %v24, %v107
  %v109 = vpop.f32.mrb[0].mxu0
  %110 = vdwg.mxu0
  %v111 = vmax.f32 %v103, 0.0
  %v112 = vmax.f32 %v108, 0.0
  %v113 = vld [vmem:[%s2 + $0x10] sm:$0xff]
  %v114 = vld [vmem:[%s2 + $0x18] sm:$0xff]
  %v115 = vld [vmem:[%s2 + $0x20] sm:$0xff]
  %v116 = vld [vmem:[%s2 + $0x28] sm:$0xff]
  %v117 = vld [vmem:[%s2 + $0xd0] sm:$0x1]
  %vm118 = vcmask 261120
  %v120 = vsel %vm118, %v111, 0
  %v123 = vsel %vm118, %v112, 0
  %125 = vmatprep.subr.mxu0 0.0
  %126 = vmatpush1.msra.mxu0 %v113
  %127 = vmatprep.subr.mxu0 0.0
  %128 = vmatpush1.msra.mxu0 %v114
  %129 = vmatprep.subr.mxu0 0.0
  %130 = vmatpush1.msra.mxu0 %v115
  %131 = vmatprep.subr.mxu0 0.0
  %132 = vmatpush1.msra.mxu0 %v116
  %133 = vmatprep.subr.mxu0 0.0
  %134 = vmatpush1.msra.mxu0 0.0
  %135 = vmatprep.subr.mxu0 0.0
  %136 = vmatpush1.msra.mxu0 0.0
  %137 = vmatprep.subr.mxu0 0.0
  %138 = vmatpush1.msra.mxu0 0.0
  %139 = vmatprep.subr.mxu0 0.0
  %140 = vmatpush1.msra.mxu0 0.0
  %141 = vmatprep.subr.mxu0 0.0
  %142 = vmatpush1.msra.mxu0 0.0
  %143 = vmatprep.subr.mxu0 0.0
  %144 = vmatpush1.msra.mxu0 0.0
  %145 = vmatprep.subr.mxu0 0.0
  %146 = vmatpush1.msra.mxu0 0.0
  %147 = vmatprep.subr.mxu0 0.0
  %148 = vmatpush1.msra.mxu0 0.0
  %149 = vmatprep.subr.mxu0 0.0
  %150 = vmatpush1.msra.mxu0 0.0
  %151 = vmatprep.subr.mxu0 0.0
  %152 = vmatpush1.msra.mxu0 0.0
  %153 = vmatprep.subr.mxu0 0.0
  %154 = vmatpush1.msra.mxu0 0.0
  %155 = vmatprep.subr.mxu0 0.0
  %156 = vmatpush1.msra.mxu0 0.0
  %157 = vmatprep.subr.mxu0 0.0
  %158 = vmatpush1.msra.mxu0 0.0
  %159 = vmatprep.subr.mxu0 0.0
  %160 = vmatpush1.msra.mxu0 0.0
  %161 = vmatprep.subr.mxu0 0.0
  %162 = vmatpush1.msra.mxu0 0.0
  %163 = vmatprep.subr.mxu0 0.0
  %164 = vmatpush1.msra.mxu0 0.0
  %165 = vmatprep.subr.mxu0 0.0
  %166 = vmatpush1.msra.mxu0 0.0
  %167 = vmatprep.subr.mxu0 0.0
  %168 = vmatpush1.msra.mxu0 0.0
  %169 = vmatprep.subr.mxu0 0.0
  %170 = vmatpush1.msra.mxu0 0.0
  %171 = vmatprep.subr.mxu0 0.0
  %172 = vmatpush1.msra.mxu0 0.0
  %173 = vmatprep.subr.mxu0 0.0
  %174 = vmatpush1.msra.mxu0 0.0
  %175 = vmatprep.subr.mxu0 0.0
  %176 = vmatpush1.msra.mxu0 0.0
  %177 = vmatprep.subr.mxu0 0.0
  %178 = vmatpush1.msra.mxu0 0.0
  %179 = vmatprep.subr.mxu0 0.0
  %180 = vmatpush1.msra.mxu0 0.0
  %181 = vmatprep.subr.mxu0 0.0
  %182 = vmatpush1.msra.mxu0 0.0
  %183 = vmatprep.subr.mxu0 0.0
  %184 = vmatpush1.msra.mxu0 0.0
  %185 = vmatprep.subr.mxu0 0.0
  %186 = vmatpush1.msra.mxu0 0.0
  %187 = vmatprep.subr.mxu0 0.0
  %188 = vmatpush1.msra.mxu0 0.0
  %189 = vmatprep.mubr.f32.mxu0 0.0
  %190 = vmatmul.mubr.f32.gmra.mrb[0].mxu0 %v120
  %v191 = vpop.f32.mrb[0].mxu0
  %v192 = vadd.f32 0.0, %v191
  %v193 = vpop.f32.mrb[0].mxu0
  %194 = vmatprep.mubr.f32.mxu0 0.0
  %195 = vmatmul.mubr.f32.gmra.mrb[0].mxu0 %v123
  %v196 = vpop.f32.mrb[0].mxu0
  %v197 = vadd.f32 0.0, %v196
  %v198 = vpop.f32.mrb[0].mxu0
  %199 = vdwg.mxu0
  %v200 = vlaneseq
  %v201 = vshrl.u32 %v200, 7
  %v202 = vsub.s32 0, %v201
  %v203 = vrot.slane %v117, %v202
  %vm204 = vcmask 130048
  %v206 = vsel %vm204, %v14, 0
  %v209 = vsel %vm204, %v15, 0
  %211 = vmatprep.subr.mxu0 0.0
  %212 = vmatpush1.msra.mxu0 %v192
  %213 = vmatprep.subr.mxu0 0.0
  %214 = vmatpush1.msra.mxu0 %v197
  %215 = vmatprep.subr.mxu0 0.0
  %216 = vmatpush1.msra.mxu0 0.0
  %217 = vmatprep.subr.mxu0 0.0
  %218 = vmatpush1.msra.mxu0 0.0
  %219 = vmatprep.subr.mxu0 0.0
  %220 = vmatpush1.msra.mxu0 0.0
  %221 = vmatprep.subr.mxu0 0.0
  %222 = vmatpush1.msra.mxu0 0.0
  %223 = vmatprep.subr.mxu0 0.0
  %224 = vmatpush1.msra.mxu0 0.0
  %225 = vmatprep.subr.mxu0 0.0
  %226 = vmatpush1.msra.mxu0 0.0
  %227 = vmatprep.subr.mxu0 0.0
  %228 = vmatpush1.msra.mxu0 0.0
  %229 = vmatprep.subr.mxu0 0.0
  %230 = vmatpush1.msra.mxu0 0.0
  %231 = vmatprep.subr.mxu0 0.0
  %232 = vmatpush1.msra.mxu0 0.0
  %233 = vmatprep.subr.mxu0 0.0
  %234 = vmatpush1.msra.mxu0 0.0
  %235 = vmatprep.subr.mxu0 0.0
  %236 = vmatpush1.msra.mxu0 0.0
  %237 = vmatprep.subr.mxu0 0.0
  %238 = vmatpush1.msra.mxu0 0.0
  %239 = vmatprep.subr.mxu0 0.0
  %240 = vmatpush1.msra.mxu0 0.0
  %241 = vmatprep.subr.mxu0 0.0
  %242 = vmatpush1.msra.mxu0 0.0
  %243 = vmatprep.subr.mxu0 0.0
  %244 = vmatpush1.msra.mxu0 0.0
  %245 = vmatprep.subr.mxu0 0.0
  %246 = vmatpush1.msra.mxu0 0.0
  %247 = vmatprep.subr.mxu0 0.0
  %248 = vmatpush1.msra.mxu0 0.0
  %249 = vmatprep.subr.mxu0 0.0
  %250 = vmatpush1.msra.mxu0 0.0
  %251 = vmatprep.subr.mxu0 0.0
  %252 = vmatpush1.msra.mxu0 0.0
  %253 = vmatprep.subr.mxu0 0.0
  %254 = vmatpush1.msra.mxu0 0.0
  %255 = vmatprep.subr.mxu0 0.0
  %256 = vmatpush1.msra.mxu0 0.0
  %257 = vmatprep.subr.mxu0 0.0
  %258 = vmatpush1.msra.mxu0 0.0
  %259 = vmatprep.subr.mxu0 0.0
  %260 = vmatpush1.msra.mxu0 0.0
  %261 = vmatprep.subr.mxu0 0.0
  %262 = vmatpush1.msra.mxu0 0.0
  %263 = vmatprep.subr.mxu0 0.0
  %264 = vmatpush1.msra.mxu0 0.0
  %265 = vmatprep.subr.mxu0 0.0
  %266 = vmatpush1.msra.mxu0 0.0
  %267 = vmatprep.subr.mxu0 0.0
  %268 = vmatpush1.msra.mxu0 0.0
  %269 = vmatprep.subr.mxu0 0.0
  %270 = vmatpush1.msra.mxu0 0.0
  %271 = vmatprep.subr.mxu0 0.0
  %272 = vmatpush1.msra.mxu0 0.0
  %273 = vmatprep.subr.mxu0 0.0
  %274 = vmatpush1.msra.mxu0 0.0
  %275 = vmatprep.mubr.f32.mxu0 0.0
  %276 = vmatmul.mubr.f32.gmra.mrb[0].mxu0 %v206
  %v277 = vpop.f32.mrb[0].mxu0
  %v278 = vadd.f32 %v203, %v277
  %v279 = vpop.f32.mrb[0].mxu0
  %280 = vmatprep.mubr.f32.mxu0 0.0
  %281 = vmatmul.mubr.f32.gmra.mrb[0].mxu0 %v209
  %v282 = vpop.f32.mrb[0].mxu0
  %v283 = vadd.f32 %v203, %v282
  %v284 = vpop.f32.mrb[0].mxu0
  %285 = vdwg.mxu0
  %v286 = vmax.f32 %v278, 0.0
  %v287 = vmax.f32 %v283, 0.0
  %v288 = vld [vmem:[%s2 + $0x30] sm:$0xff]
  %v289 = vld [vmem:[%s2 + $0x38] sm:$0xff]
  %v290 = vld [vmem:[%s2 + $0x40] sm:$0xff]
  %v291 = vld [vmem:[%s2 + $0x48] sm:$0xff]
  %v292 = vld [vmem:[%s2 + $0xd8] sm:$0x1]
  %v294 = vsel %vm118, %v286, 0
  %v297 = vsel %vm118, %v287, 0
  %299 = vmatprep.subr.mxu0 0.0
  %300 = vmatpush1.msra.mxu0 %v288
  %301 = vmatprep.subr.mxu0 0.0
  %302 = vmatpush1.msra.mxu0 %v289
  %303 = vmatprep.subr.mxu0 0.0
  %304 = vmatpush1.msra.mxu0 %v290
  %305 = vmatprep.subr.mxu0 0.0
  %306 = vmatpush1.msra.mxu0 %v291
  %307 = vmatprep.subr.mxu0 0.0
  %308 = vmatpush1.msra.mxu0 0.0
  %309 = vmatprep.subr.mxu0 0.0
  %310 = vmatpush1.msra.mxu0 0.0
  %311 = vmatprep.subr.mxu0 0.0
  %312 = vmatpush1.msra.mxu0 0.0
  %313 = vmatprep.subr.mxu0 0.0
  %314 = vmatpush1.msra.mxu0 0.0
  %315 = vmatprep.subr.mxu0 0.0
  %316 = vmatpush1.msra.mxu0 0.0
  %317 = vmatprep.subr.mxu0 0.0
  %318 = vmatpush1.msra.mxu0 0.0
  %319 = vmatprep.subr.mxu0 0.0
  %320 = vmatpush1.msra.mxu0 0.0
  %321 = vmatprep.subr.mxu0 0.0
  %322 = vmatpush1.msra.mxu0 0.0
  %323 = vmatprep.subr.mxu0 0.0
  %324 = vmatpush1.msra.mxu0 0.0
  %325 = vmatprep.subr.mxu0 0.0
  %326 = vmatpush1.msra.mxu0 0.0
  %327 = vmatprep.subr.mxu0 0.0
  %328 = vmatpush1.msra.mxu0 0.0
  %329 = vmatprep.subr.mxu0 0.0
  %330 = vmatpush1.msra.mxu0 0.0
  %331 = vmatprep.subr.mxu0 0.0
  %332 = vmatpush1.msra.mxu0 0.0
  %333 = vmatprep.subr.mxu0 0.0
  %334 = vmatpush1.msra.mxu0 0.0
  %335 = vmatprep.subr.mxu0 0.0
  %336 = vmatpush1.msra.mxu0 0.0
  %337 = vmatprep.subr.mxu0 0.0
  %338 = vmatpush1.msra.mxu0 0.0
  %339 = vmatprep.subr.mxu0 0.0
  %340 = vmatpush1.msra.mxu0 0.0
  %341 = vmatprep.subr.mxu0 0.0
  %342 = vmatpush1.msra.mxu0 0.0
  %343 = vmatprep.subr.mxu0 0.0
  %344 = vmatpush1.msra.mxu0 0.0
  %345 = vmatprep.subr.mxu0 0.0
  %346 = vmatpush1.msra.mxu0 0.0
  %347 = vmatprep.subr.mxu0 0.0
  %348 = vmatpush1.msra.mxu0 0.0
  %349 = vmatprep.subr.mxu0 0.0
  %350 = vmatpush1.msra.mxu0 0.0
  %351 = vmatprep.subr.mxu0 0.0
  %352 = vmatpush1.msra.mxu0 0.0
  %353 = vmatprep.subr.mxu0 0.0
  %354 = vmatpush1.msra.mxu0 0.0
  %355 = vmatprep.subr.mxu0 0.0
  %356 = vmatpush1.msra.mxu0 0.0
  %357 = vmatprep.subr.mxu0 0.0
  %358 = vmatpush1.msra.mxu0 0.0
  %359 = vmatprep.subr.mxu0 0.0
  %360 = vmatpush1.msra.mxu0 0.0
  %361 = vmatprep.subr.mxu0 0.0
  %362 = vmatpush1.msra.mxu0 0.0
  %363 = vmatprep.mubr.f32.mxu0 0.0
  %364 = vmatmul.mubr.f32.gmra.mrb[0].mxu0 %v294
  %v365 = vpop.f32.mrb[0].mxu0
  %v366 = vadd.f32 0.0, %v365
  %v367 = vpop.f32.mrb[0].mxu0
  %368 = vmatprep.mubr.f32.mxu0 0.0
  %369 = vmatmul.mubr.f32.gmra.mrb[0].mxu0 %v297
  %v370 = vpop.f32.mrb[0].mxu0
  %v371 = vadd.f32 0.0, %v370
  %v372 = vpop.f32.mrb[0].mxu0
  %373 = vdwg.mxu0
  %v374 = vlaneseq
  %v375 = vshrl.u32 %v374, 7
  %v376 = vsub.s32 0, %v375
  %v377 = vrot.slane %v292, %v376
  %378 = vmatprep.subr.mxu0 0.0
  %379 = vmatpush1.msra.mxu0 %v366
  %380 = vmatprep.subr.mxu0 0.0
  %381 = vmatpush1.msra.mxu0 %v371
  %382 = vmatprep.subr.mxu0 0.0
  %383 = vmatpush1.msra.mxu0 0.0
  %384 = vmatprep.subr.mxu0 0.0
  %385 = vmatpush1.msra.mxu0 0.0
  %386 = vmatprep.subr.mxu0 0.0
  %387 = vmatpush1.msra.mxu0 0.0
  %388 = vmatprep.subr.mxu0 0.0
  %389 = vmatpush1.msra.mxu0 0.0
  %390 = vmatprep.subr.mxu0 0.0
  %391 = vmatpush1.msra.mxu0 0.0
  %392 = vmatprep.subr.mxu0 0.0
  %393 = vmatpush1.msra.mxu0 0.0
  %394 = vmatprep.subr.mxu0 0.0
  %395 = vmatpush1.msra.mxu0 0.0
  %396 = vmatprep.subr.mxu0 0.0
  %397 = vmatpush1.msra.mxu0 0.0
  %398 = vmatprep.subr.mxu0 0.0
  %399 = vmatpush1.msra.mxu0 0.0
  %400 = vmatprep.subr.mxu0 0.0
  %401 = vmatpush1.msra.mxu0 0.0
  %402 = vmatprep.subr.mxu0 0.0
  %403 = vmatpush1.msra.mxu0 0.0
  %404 = vmatprep.subr.mxu0 0.0
  %405 = vmatpush1.msra.mxu0 0.0
  %406 = vmatprep.subr.mxu0 0.0
  %407 = vmatpush1.msra.mxu0 0.0
  %408 = vmatprep.subr.mxu0 0.0
  %409 = vmatpush1.msra.mxu0 0.0
  %410 = vmatprep.subr.mxu0 0.0
  %411 = vmatpush1.msra.mxu0 0.0
  %412 = vmatprep.subr.mxu0 0.0
  %413 = vmatpush1.msra.mxu0 0.0
  %414 = vmatprep.subr.mxu0 0.0
  %415 = vmatpush1.msra.mxu0 0.0
  %416 = vmatprep.subr.mxu0 0.0
  %417 = vmatpush1.msra.mxu0 0.0
  %418 = vmatprep.subr.mxu0 0.0
  %419 = vmatpush1.msra.mxu0 0.0
  %420 = vmatprep.subr.mxu0 0.0
  %421 = vmatpush1.msra.mxu0 0.0
  %422 = vmatprep.subr.mxu0 0.0
  %423 = vmatpush1.msra.mxu0 0.0
  %424 = vmatprep.subr.mxu0 0.0
  %425 = vmatpush1.msra.mxu0 0.0
  %426 = vmatprep.subr.mxu0 0.0
  %427 = vmatpush1.msra.mxu0 0.0
  %428 = vmatprep.subr.mxu0 0.0
  %429 = vmatpush1.msra.mxu0 0.0
  %430 = vmatprep.subr.mxu0 0.0
  %431 = vmatpush1.msra.mxu0 0.0
  %432 = vmatprep.subr.mxu0 0.0
  %433 = vmatpush1.msra.mxu0 0.0
  %434 = vmatprep.subr.mxu0 0.0
  %435 = vmatpush1.msra.mxu0 0.0
  %436 = vmatprep.subr.mxu0 0.0
  %437 = vmatpush1.msra.mxu0 0.0
  %438 = vmatprep.subr.mxu0 0.0
  %439 = vmatpush1.msra.mxu0 0.0
  %440 = vmatprep.subr.mxu0 0.0
  %441 = vmatpush1.msra.mxu0 0.0
  %442 = vmatprep.mubr.f32.mxu0 0.0
  %443 = vmatmul.mubr.f32.gmra.mrb[0].mxu0 %v206
  %v444 = vpop.f32.mrb[0].mxu0
  %v445 = vadd.f32 %v377, %v444
  %v446 = vpop.f32.mrb[0].mxu0
  %447 = vmatprep.mubr.f32.mxu0 0.0
  %448 = vmatmul.mubr.f32.gmra.mrb[0].mxu0 %v209
  %v449 = vpop.f32.mrb[0].mxu0
  %v450 = vadd.f32 %v377, %v449
  %v451 = vpop.f32.mrb[0].mxu0
  %452 = vdwg.mxu0
  %v453 = vmax.f32 %v445, 0.0
  %v454 = vmax.f32 %v450, 0.0
  %v455 = vld [vmem:[%s2 + $0x50] sm:$0xff]
  %v456 = vld [vmem:[%s2 + $0x58] sm:$0xff]
  %v457 = vld [vmem:[%s2 + $0x60] sm:$0xff]
  %v458 = vld [vmem:[%s2 + $0x68] sm:$0xff]
  %v459 = vld [vmem:[%s2 + $0xe0] sm:$0x1]
  %v461 = vsel %vm118, %v453, 0
  %v464 = vsel %vm118, %v454, 0
  %466 = vmatprep.subr.mxu0 0.0
  %467 = vmatpush1.msra.mxu0 %v455
  %468 = vmatprep.subr.mxu0 0.0
  %469 = vmatpush1.msra.mxu0 %v456
  %470 = vmatprep.subr.mxu0 0.0
  %471 = vmatpush1.msra.mxu0 %v457
  %472 = vmatprep.subr.mxu0 0.0
  %473 = vmatpush1.msra.mxu0 %v458
  %474 = vmatprep.subr.mxu0 0.0
  %475 = vmatpush1.msra.mxu0 0.0
  %476 = vmatprep.subr.mxu0 0.0
  %477 = vmatpush1.msra.mxu0 0.0
  %478 = vmatprep.subr.mxu0 0.0
  %479 = vmatpush1.msra.mxu0 0.0
  %480 = vmatprep.subr.mxu0 0.0
  %481 = vmatpush1.msra.mxu0 0.0
  %482 = vmatprep.subr.mxu0 0.0
  %483 = vmatpush1.msra.mxu0 0.0
  %484 = vmatprep.subr.mxu0 0.0
  %485 = vmatpush1.msra.mxu0 0.0
  %486 = vmatprep.subr.mxu0 0.0
  %487 = vmatpush1.msra.mxu0 0.0
  %488 = vmatprep.subr.mxu0 0.0
  %489 = vmatpush1.msra.mxu0 0.0
  %490 = vmatprep.subr.mxu0 0.0
  %491 = vmatpush1.msra.mxu0 0.0
  %492 = vmatprep.subr.mxu0 0.0
  %493 = vmatpush1.msra.mxu0 0.0
  %494 = vmatprep.subr.mxu0 0.0
  %495 = vmatpush1.msra.mxu0 0.0
  %496 = vmatprep.subr.mxu0 0.0
  %497 = vmatpush1.msra.mxu0 0.0
  %498 = vmatprep.subr.mxu0 0.0
  %499 = vmatpush1.msra.mxu0 0.0
  %500 = vmatprep.subr.mxu0 0.0
  %501 = vmatpush1.msra.mxu0 0.0
  %502 = vmatprep.subr.mxu0 0.0
  %503 = vmatpush1.msra.mxu0 0.0
  %504 = vmatprep.subr.mxu0 0.0
  %505 = vmatpush1.msra.mxu0 0.0
  %506 = vmatprep.subr.mxu0 0.0
  %507 = vmatpush1.msra.mxu0 0.0
  %508 = vmatprep.subr.mxu0 0.0
  %509 = vmatpush1.msra.mxu0 0.0
  %510 = vmatprep.subr.mxu0 0.0
  %511 = vmatpush1.msra.mxu0 0.0
  %512 = vmatprep.subr.mxu0 0.0
  %513 = vmatpush1.msra.mxu0 0.0
  %514 = vmatprep.subr.mxu0 0.0
  %515 = vmatpush1.msra.mxu0 0.0
  %516 = vmatprep.subr.mxu0 0.0
  %517 = vmatpush1.msra.mxu0 0.0
  %518 = vmatprep.subr.mxu0 0.0
  %519 = vmatpush1.msra.mxu0 0.0
  %520 = vmatprep.subr.mxu0 0.0
  %521 = vmatpush1.msra.mxu0 0.0
  %522 = vmatprep.subr.mxu0 0.0
  %523 = vmatpush1.msra.mxu0 0.0
  %524 = vmatprep.subr.mxu0 0.0
  %525 = vmatpush1.msra.mxu0 0.0
  %526 = vmatprep.subr.mxu0 0.0
  %527 = vmatpush1.msra.mxu0 0.0
  %528 = vmatprep.subr.mxu0 0.0
  %529 = vmatpush1.msra.mxu0 0.0
  %530 = vmatprep.mubr.f32.mxu0 0.0
  %531 = vmatmul.mubr.f32.gmra.mrb[0].mxu0 %v461
  %v532 = vpop.f32.mrb[0].mxu0
  %v533 = vadd.f32 0.0, %v532
  %v534 = vpop.f32.mrb[0].mxu0
  %535 = vmatprep.mubr.f32.mxu0 0.0
  %536 = vmatmul.mubr.f32.gmra.mrb[0].mxu0 %v464
  %v537 = vpop.f32.mrb[0].mxu0
  %v538 = vadd.f32 0.0, %v537
  %v539 = vpop.f32.mrb[0].mxu0
  %540 = vdwg.mxu0
  %v541 = vlaneseq
  %v542 = vshrl.u32 %v541, 7
  %v543 = vsub.s32 0, %v542
  %v544 = vrot.slane %v459, %v543
  %545 = vmatprep.subr.mxu0 0.0
  %546 = vmatpush1.msra.mxu0 %v533
  %547 = vmatprep.subr.mxu0 0.0
  %548 = vmatpush1.msra.mxu0 %v538
  %549 = vmatprep.subr.mxu0 0.0
  %550 = vmatpush1.msra.mxu0 0.0
  %551 = vmatprep.subr.mxu0 0.0
  %552 = vmatpush1.msra.mxu0 0.0
  %553 = vmatprep.subr.mxu0 0.0
  %554 = vmatpush1.msra.mxu0 0.0
  %555 = vmatprep.subr.mxu0 0.0
  %556 = vmatpush1.msra.mxu0 0.0
  %557 = vmatprep.subr.mxu0 0.0
  %558 = vmatpush1.msra.mxu0 0.0
  %559 = vmatprep.subr.mxu0 0.0
  %560 = vmatpush1.msra.mxu0 0.0
  %561 = vmatprep.subr.mxu0 0.0
  %562 = vmatpush1.msra.mxu0 0.0
  %563 = vmatprep.subr.mxu0 0.0
  %564 = vmatpush1.msra.mxu0 0.0
  %565 = vmatprep.subr.mxu0 0.0
  %566 = vmatpush1.msra.mxu0 0.0
  %567 = vmatprep.subr.mxu0 0.0
  %568 = vmatpush1.msra.mxu0 0.0
  %569 = vmatprep.subr.mxu0 0.0
  %570 = vmatpush1.msra.mxu0 0.0
  %571 = vmatprep.subr.mxu0 0.0
  %572 = vmatpush1.msra.mxu0 0.0
  %573 = vmatprep.subr.mxu0 0.0
  %574 = vmatpush1.msra.mxu0 0.0
  %575 = vmatprep.subr.mxu0 0.0
  %576 = vmatpush1.msra.mxu0 0.0
  %577 = vmatprep.subr.mxu0 0.0
  %578 = vmatpush1.msra.mxu0 0.0
  %579 = vmatprep.subr.mxu0 0.0
  %580 = vmatpush1.msra.mxu0 0.0
  %581 = vmatprep.subr.mxu0 0.0
  %582 = vmatpush1.msra.mxu0 0.0
  %583 = vmatprep.subr.mxu0 0.0
  %584 = vmatpush1.msra.mxu0 0.0
  %585 = vmatprep.subr.mxu0 0.0
  %586 = vmatpush1.msra.mxu0 0.0
  %587 = vmatprep.subr.mxu0 0.0
  %588 = vmatpush1.msra.mxu0 0.0
  %589 = vmatprep.subr.mxu0 0.0
  %590 = vmatpush1.msra.mxu0 0.0
  %591 = vmatprep.subr.mxu0 0.0
  %592 = vmatpush1.msra.mxu0 0.0
  %593 = vmatprep.subr.mxu0 0.0
  %594 = vmatpush1.msra.mxu0 0.0
  %595 = vmatprep.subr.mxu0 0.0
  %596 = vmatpush1.msra.mxu0 0.0
  %597 = vmatprep.subr.mxu0 0.0
  %598 = vmatpush1.msra.mxu0 0.0
  %599 = vmatprep.subr.mxu0 0.0
  %600 = vmatpush1.msra.mxu0 0.0
  %601 = vmatprep.subr.mxu0 0.0
  %602 = vmatpush1.msra.mxu0 0.0
  %603 = vmatprep.subr.mxu0 0.0
  %604 = vmatpush1.msra.mxu0 0.0
  %605 = vmatprep.subr.mxu0 0.0
  %606 = vmatpush1.msra.mxu0 0.0
  %607 = vmatprep.subr.mxu0 0.0
  %608 = vmatpush1.msra.mxu0 0.0
  %609 = vmatprep.mubr.f32.mxu0 0.0
  %610 = vmatmul.mubr.f32.gmra.mrb[0].mxu0 %v206
  %v611 = vpop.f32.mrb[0].mxu0
  %v612 = vadd.f32 %v544, %v611
  %v613 = vpop.f32.mrb[0].mxu0
  %614 = vmatprep.mubr.f32.mxu0 0.0
  %615 = vmatmul.mubr.f32.gmra.mrb[0].mxu0 %v209
  %v616 = vpop.f32.mrb[0].mxu0
  %v617 = vadd.f32 %v544, %v616
  %v618 = vpop.f32.mrb[0].mxu0
  %619 = vdwg.mxu0
  %v620 = vmax.f32 %v612, 0.0
  %v621 = vmax.f32 %v617, 0.0
  %v622 = vld [vmem:[%s2 + $0x70] sm:$0xff]
  %v623 = vld [vmem:[%s2 + $0x78] sm:$0xff]
  %v624 = vld [vmem:[%s2 + $0x80] sm:$0xff]
  %v625 = vld [vmem:[%s2 + $0x88] sm:$0xff]
  %v626 = vld [vmem:[%s2 + $0xe8] sm:$0x1]
  %v628 = vsel %vm118, %v620, 0
  %v631 = vsel %vm118, %v621, 0
  %633 = vmatprep.subr.mxu0 0.0
  %634 = vmatpush1.msra.mxu0 %v622
  %635 = vmatprep.subr.mxu0 0.0
  %636 = vmatpush1.msra.mxu0 %v623
  %637 = vmatprep.subr.mxu0 0.0
  %638 = vmatpush1.msra.mxu0 %v624
  %639 = vmatprep.subr.mxu0 0.0
  %640 = vmatpush1.msra.mxu0 %v625
  %641 = vmatprep.subr.mxu0 0.0
  %642 = vmatpush1.msra.mxu0 0.0
  %643 = vmatprep.subr.mxu0 0.0
  %644 = vmatpush1.msra.mxu0 0.0
  %645 = vmatprep.subr.mxu0 0.0
  %646 = vmatpush1.msra.mxu0 0.0
  %647 = vmatprep.subr.mxu0 0.0
  %648 = vmatpush1.msra.mxu0 0.0
  %649 = vmatprep.subr.mxu0 0.0
  %650 = vmatpush1.msra.mxu0 0.0
  %651 = vmatprep.subr.mxu0 0.0
  %652 = vmatpush1.msra.mxu0 0.0
  %653 = vmatprep.subr.mxu0 0.0
  %654 = vmatpush1.msra.mxu0 0.0
  %655 = vmatprep.subr.mxu0 0.0
  %656 = vmatpush1.msra.mxu0 0.0
  %657 = vmatprep.subr.mxu0 0.0
  %658 = vmatpush1.msra.mxu0 0.0
  %659 = vmatprep.subr.mxu0 0.0
  %660 = vmatpush1.msra.mxu0 0.0
  %661 = vmatprep.subr.mxu0 0.0
  %662 = vmatpush1.msra.mxu0 0.0
  %663 = vmatprep.subr.mxu0 0.0
  %664 = vmatpush1.msra.mxu0 0.0
  %665 = vmatprep.subr.mxu0 0.0
  %666 = vmatpush1.msra.mxu0 0.0
  %667 = vmatprep.subr.mxu0 0.0
  %668 = vmatpush1.msra.mxu0 0.0
  %669 = vmatprep.subr.mxu0 0.0
  %670 = vmatpush1.msra.mxu0 0.0
  %671 = vmatprep.subr.mxu0 0.0
  %672 = vmatpush1.msra.mxu0 0.0
  %673 = vmatprep.subr.mxu0 0.0
  %674 = vmatpush1.msra.mxu0 0.0
  %675 = vmatprep.subr.mxu0 0.0
  %676 = vmatpush1.msra.mxu0 0.0
  %677 = vmatprep.subr.mxu0 0.0
  %678 = vmatpush1.msra.mxu0 0.0
  %679 = vmatprep.subr.mxu0 0.0
  %680 = vmatpush1.msra.mxu0 0.0
  %681 = vmatprep.subr.mxu0 0.0
  %682 = vmatpush1.msra.mxu0 0.0
  %683 = vmatprep.subr.mxu0 0.0
  %684 = vmatpush1.msra.mxu0 0.0
  %685 = vmatprep.subr.mxu0 0.0
  %686 = vmatpush1.msra.mxu0 0.0
  %687 = vmatprep.subr.mxu0 0.0
  %688 = vmatpush1.msra.mxu0 0.0
  %689 = vmatprep.subr.mxu0 0.0
  %690 = vmatpush1.msra.mxu0 0.0
  %691 = vmatprep.subr.mxu0 0.0
  %692 = vmatpush1.msra.mxu0 0.0
  %693 = vmatprep.subr.mxu0 0.0
  %694 = vmatpush1.msra.mxu0 0.0
  %695 = vmatprep.subr.mxu0 0.0
  %696 = vmatpush1.msra.mxu0 0.0
  %697 = vmatprep.mubr.f32.mxu0 0.0
  %698 = vmatmul.mubr.f32.gmra.mrb[0].mxu0 %v628
  %v699 = vpop.f32.mrb[0].mxu0
  %v700 = vadd.f32 0.0, %v699
  %v701 = vpop.f32.mrb[0].mxu0
  %702 = vmatprep.mubr.f32.mxu0 0.0
  %703 = vmatmul.mubr.f32.gmra.mrb[0].mxu0 %v631
  %v704 = vpop.f32.mrb[0].mxu0
  %v705 = vadd.f32 0.0, %v704
  %v706 = vpop.f32.mrb[0].mxu0
  %707 = vdwg.mxu0
  %v708 = vlaneseq
  %v709 = vshrl.u32 %v708, 7
  %v710 = vsub.s32 0, %v709
  %v711 = vrot.slane %v626, %v710
  %712 = vmatprep.subr.mxu0 0.0
  %713 = vmatpush1.msra.mxu0 %v700
  %714 = vmatprep.subr.mxu0 0.0
  %715 = vmatpush1.msra.mxu0 %v705
  %716 = vmatprep.subr.mxu0 0.0
  %717 = vmatpush1.msra.mxu0 0.0
  %718 = vmatprep.subr.mxu0 0.0
  %719 = vmatpush1.msra.mxu0 0.0
  %720 = vmatprep.subr.mxu0 0.0
  %721 = vmatpush1.msra.mxu0 0.0
  %722 = vmatprep.subr.mxu0 0.0
  %723 = vmatpush1.msra.mxu0 0.0
  %724 = vmatprep.subr.mxu0 0.0
  %725 = vmatpush1.msra.mxu0 0.0
  %726 = vmatprep.subr.mxu0 0.0
  %727 = vmatpush1.msra.mxu0 0.0
  %728 = vmatprep.subr.mxu0 0.0
  %729 = vmatpush1.msra.mxu0 0.0
  %730 = vmatprep.subr.mxu0 0.0
  %731 = vmatpush1.msra.mxu0 0.0
  %732 = vmatprep.subr.mxu0 0.0
  %733 = vmatpush1.msra.mxu0 0.0
  %734 = vmatprep.subr.mxu0 0.0
  %735 = vmatpush1.msra.mxu0 0.0
  %736 = vmatprep.subr.mxu0 0.0
  %737 = vmatpush1.msra.mxu0 0.0
  %738 = vmatprep.subr.mxu0 0.0
  %739 = vmatpush1.msra.mxu0 0.0
  %740 = vmatprep.subr.mxu0 0.0
  %741 = vmatpush1.msra.mxu0 0.0
  %742 = vmatprep.subr.mxu0 0.0
  %743 = vmatpush1.msra.mxu0 0.0
  %744 = vmatprep.subr.mxu0 0.0
  %745 = vmatpush1.msra.mxu0 0.0
  %746 = vmatprep.subr.mxu0 0.0
  %747 = vmatpush1.msra.mxu0 0.0
  %748 = vmatprep.subr.mxu0 0.0
  %749 = vmatpush1.msra.mxu0 0.0
  %750 = vmatprep.subr.mxu0 0.0
  %751 = vmatpush1.msra.mxu0 0.0
  %752 = vmatprep.subr.mxu0 0.0
  %753 = vmatpush1.msra.mxu0 0.0
  %754 = vmatprep.subr.mxu0 0.0
  %755 = vmatpush1.msra.mxu0 0.0
  %756 = vmatprep.subr.mxu0 0.0
  %757 = vmatpush1.msra.mxu0 0.0
  %758 = vmatprep.subr.mxu0 0.0
  %759 = vmatpush1.msra.mxu0 0.0
  %760 = vmatprep.subr.mxu0 0.0
  %761 = vmatpush1.msra.mxu0 0.0
  %762 = vmatprep.subr.mxu0 0.0
  %763 = vmatpush1.msra.mxu0 0.0
  %764 = vmatprep.subr.mxu0 0.0
  %765 = vmatpush1.msra.mxu0 0.0
  %766 = vmatprep.subr.mxu0 0.0
  %767 = vmatpush1.msra.mxu0 0.0
  %768 = vmatprep.subr.mxu0 0.0
  %769 = vmatpush1.msra.mxu0 0.0
  %770 = vmatprep.subr.mxu0 0.0
  %771 = vmatpush1.msra.mxu0 0.0
  %772 = vmatprep.subr.mxu0 0.0
  %773 = vmatpush1.msra.mxu0 0.0
  %774 = vmatprep.subr.mxu0 0.0
  %775 = vmatpush1.msra.mxu0 0.0
  %776 = vmatprep.mubr.f32.mxu0 0.0
  %777 = vmatmul.mubr.f32.gmra.mrb[0].mxu0 %v206
  %v778 = vpop.f32.mrb[0].mxu0
  %v779 = vadd.f32 %v711, %v778
  %v780 = vpop.f32.mrb[0].mxu0
  %781 = vmatprep.mubr.f32.mxu0 0.0
  %782 = vmatmul.mubr.f32.gmra.mrb[0].mxu0 %v209
  %v783 = vpop.f32.mrb[0].mxu0
  %v784 = vadd.f32 %v711, %v783
  %v785 = vpop.f32.mrb[0].mxu0
  %786 = vdwg.mxu0
  %v787 = vmax.f32 %v779, 0.0
  %v788 = vmax.f32 %v784, 0.0
  %v789 = vld [vmem:[%s2 + $0x90] sm:$0xff]
  %v790 = vld [vmem:[%s2 + $0x98] sm:$0xff]
  %v791 = vld [vmem:[%s2 + $0xa0] sm:$0xff]
  %v792 = vld [vmem:[%s2 + $0xa8] sm:$0xff]
  %v793 = vld [vmem:[%s2 + $0xf0] sm:$0x1]
  %v795 = vsel %vm118, %v787, 0
  %v798 = vsel %vm118, %v788, 0
  %800 = vmatprep.subr.mxu0 0.0
  %801 = vmatpush1.msra.mxu0 %v789
  %802 = vmatprep.subr.mxu0 0.0
  %803 = vmatpush1.msra.mxu0 %v790
  %804 = vmatprep.subr.mxu0 0.0
  %805 = vmatpush1.msra.mxu0 %v791
  %806 = vmatprep.subr.mxu0 0.0
  %807 = vmatpush1.msra.mxu0 %v792
  %808 = vmatprep.subr.mxu0 0.0
  %809 = vmatpush1.msra.mxu0 0.0
  %810 = vmatprep.subr.mxu0 0.0
  %811 = vmatpush1.msra.mxu0 0.0
  %812 = vmatprep.subr.mxu0 0.0
  %813 = vmatpush1.msra.mxu0 0.0
  %814 = vmatprep.subr.mxu0 0.0
  %815 = vmatpush1.msra.mxu0 0.0
  %816 = vmatprep.subr.mxu0 0.0
  %817 = vmatpush1.msra.mxu0 0.0
  %818 = vmatprep.subr.mxu0 0.0
  %819 = vmatpush1.msra.mxu0 0.0
  %820 = vmatprep.subr.mxu0 0.0
  %821 = vmatpush1.msra.mxu0 0.0
  %822 = vmatprep.subr.mxu0 0.0
  %823 = vmatpush1.msra.mxu0 0.0
  %824 = vmatprep.subr.mxu0 0.0
  %825 = vmatpush1.msra.mxu0 0.0
  %826 = vmatprep.subr.mxu0 0.0
  %827 = vmatpush1.msra.mxu0 0.0
  %828 = vmatprep.subr.mxu0 0.0
  %829 = vmatpush1.msra.mxu0 0.0
  %830 = vmatprep.subr.mxu0 0.0
  %831 = vmatpush1.msra.mxu0 0.0
  %832 = vmatprep.subr.mxu0 0.0
  %833 = vmatpush1.msra.mxu0 0.0
  %834 = vmatprep.subr.mxu0 0.0
  %835 = vmatpush1.msra.mxu0 0.0
  %836 = vmatprep.subr.mxu0 0.0
  %837 = vmatpush1.msra.mxu0 0.0
  %838 = vmatprep.subr.mxu0 0.0
  %839 = vmatpush1.msra.mxu0 0.0
  %840 = vmatprep.subr.mxu0 0.0
  %841 = vmatpush1.msra.mxu0 0.0
  %842 = vmatprep.subr.mxu0 0.0
  %843 = vmatpush1.msra.mxu0 0.0
  %844 = vmatprep.subr.mxu0 0.0
  %845 = vmatpush1.msra.mxu0 0.0
  %846 = vmatprep.subr.mxu0 0.0
  %847 = vmatpush1.msra.mxu0 0.0
  %848 = vmatprep.subr.mxu0 0.0
  %849 = vmatpush1.msra.mxu0 0.0
  %850 = vmatprep.subr.mxu0 0.0
  %851 = vmatpush1.msra.mxu0 0.0
  %852 = vmatprep.subr.mxu0 0.0
  %853 = vmatpush1.msra.mxu0 0.0
  %854 = vmatprep.subr.mxu0 0.0
  %855 = vmatpush1.msra.mxu0 0.0
  %856 = vmatprep.subr.mxu0 0.0
  %857 = vmatpush1.msra.mxu0 0.0
  %858 = vmatprep.subr.mxu0 0.0
  %859 = vmatpush1.msra.mxu0 0.0
  %860 = vmatprep.subr.mxu0 0.0
  %861 = vmatpush1.msra.mxu0 0.0
  %862 = vmatprep.subr.mxu0 0.0
  %863 = vmatpush1.msra.mxu0 0.0
  %864 = vmatprep.mubr.f32.mxu0 0.0
  %865 = vmatmul.mubr.f32.gmra.mrb[0].mxu0 %v795
  %v866 = vpop.f32.mrb[0].mxu0
  %v867 = vadd.f32 0.0, %v866
  %v868 = vpop.f32.mrb[0].mxu0
  %869 = vmatprep.mubr.f32.mxu0 0.0
  %870 = vmatmul.mubr.f32.gmra.mrb[0].mxu0 %v798
  %v871 = vpop.f32.mrb[0].mxu0
  %v872 = vadd.f32 0.0, %v871
  %v873 = vpop.f32.mrb[0].mxu0
  %874 = vdwg.mxu0
  %v875 = vlaneseq
  %v876 = vshrl.u32 %v875, 7
  %v877 = vsub.s32 0, %v876
  %v878 = vrot.slane %v793, %v877
  %879 = vmatprep.subr.mxu0 0.0
  %880 = vmatpush1.msra.mxu0 %v867
  %881 = vmatprep.subr.mxu0 0.0
  %882 = vmatpush1.msra.mxu0 %v872
  %883 = vmatprep.subr.mxu0 0.0
  %884 = vmatpush1.msra.mxu0 0.0
  %885 = vmatprep.subr.mxu0 0.0
  %886 = vmatpush1.msra.mxu0 0.0
  %887 = vmatprep.subr.mxu0 0.0
  %888 = vmatpush1.msra.mxu0 0.0
  %889 = vmatprep.subr.mxu0 0.0
  %890 = vmatpush1.msra.mxu0 0.0
  %891 = vmatprep.subr.mxu0 0.0
  %892 = vmatpush1.msra.mxu0 0.0
  %893 = vmatprep.subr.mxu0 0.0
  %894 = vmatpush1.msra.mxu0 0.0
  %895 = vmatprep.subr.mxu0 0.0
  %896 = vmatpush1.msra.mxu0 0.0
  %897 = vmatprep.subr.mxu0 0.0
  %898 = vmatpush1.msra.mxu0 0.0
  %899 = vmatprep.subr.mxu0 0.0
  %900 = vmatpush1.msra.mxu0 0.0
  %901 = vmatprep.subr.mxu0 0.0
  %902 = vmatpush1.msra.mxu0 0.0
  %903 = vmatprep.subr.mxu0 0.0
  %904 = vmatpush1.msra.mxu0 0.0
  %905 = vmatprep.subr.mxu0 0.0
  %906 = vmatpush1.msra.mxu0 0.0
  %907 = vmatprep.subr.mxu0 0.0
  %908 = vmatpush1.msra.mxu0 0.0
  %909 = vmatprep.subr.mxu0 0.0
  %910 = vmatpush1.msra.mxu0 0.0
  %911 = vmatprep.subr.mxu0 0.0
  %912 = vmatpush1.msra.mxu0 0.0
  %913 = vmatprep.subr.mxu0 0.0
  %914 = vmatpush1.msra.mxu0 0.0
  %915 = vmatprep.subr.mxu0 0.0
  %916 = vmatpush1.msra.mxu0 0.0
  %917 = vmatprep.subr.mxu0 0.0
  %918 = vmatpush1.msra.mxu0 0.0
  %919 = vmatprep.subr.mxu0 0.0
  %920 = vmatpush1.msra.mxu0 0.0
  %921 = vmatprep.subr.mxu0 0.0
  %922 = vmatpush1.msra.mxu0 0.0
  %923 = vmatprep.subr.mxu0 0.0
  %924 = vmatpush1.msra.mxu0 0.0
  %925 = vmatprep.subr.mxu0 0.0
  %926 = vmatpush1.msra.mxu0 0.0
  %927 = vmatprep.subr.mxu0 0.0
  %928 = vmatpush1.msra.mxu0 0.0
  %929 = vmatprep.subr.mxu0 0.0
  %930 = vmatpush1.msra.mxu0 0.0
  %931 = vmatprep.subr.mxu0 0.0
  %932 = vmatpush1.msra.mxu0 0.0
  %933 = vmatprep.subr.mxu0 0.0
  %934 = vmatpush1.msra.mxu0 0.0
  %935 = vmatprep.subr.mxu0 0.0
  %936 = vmatpush1.msra.mxu0 0.0
  %937 = vmatprep.subr.mxu0 0.0
  %938 = vmatpush1.msra.mxu0 0.0
  %939 = vmatprep.subr.mxu0 0.0
  %940 = vmatpush1.msra.mxu0 0.0
  %941 = vmatprep.subr.mxu0 0.0
  %942 = vmatpush1.msra.mxu0 0.0
  %943 = vmatprep.mubr.f32.mxu0 0.0
  %944 = vmatmul.mubr.f32.gmra.mrb[0].mxu0 %v206
  %v945 = vpop.f32.mrb[0].mxu0
  %v946 = vadd.f32 %v878, %v945
  %v947 = vpop.f32.mrb[0].mxu0
  %948 = vmatprep.mubr.f32.mxu0 0.0
  %949 = vmatmul.mubr.f32.gmra.mrb[0].mxu0 %v209
  %v950 = vpop.f32.mrb[0].mxu0
  %v951 = vadd.f32 %v878, %v950
  %v952 = vpop.f32.mrb[0].mxu0
  %953 = vdwg.mxu0
  %v954 = vmax.f32 %v946, 0.0
  %v955 = vmax.f32 %v951, 0.0
  %v956 = vld [vmem:[%s2 + $0xb0] sm:$0xff]
  %v957 = vld [vmem:[%s2 + $0xb8] sm:$0xff]
  %v958 = vld [vmem:[%s2 + $0xc0] sm:$0xff]
  %v959 = vld [vmem:[%s2 + $0xc8] sm:$0xff]
  %v960 = vld [vmem:[%s2 + $0xf8] sm:$0x1]
  %v962 = vsel %vm118, %v954, 0
  %v965 = vsel %vm118, %v955, 0
  %967 = vmatprep.subr.mxu0 0.0
  %968 = vmatpush1.msra.mxu0 %v956
  %969 = vmatprep.subr.mxu0 0.0
  %970 = vmatpush1.msra.mxu0 %v957
  %971 = vmatprep.subr.mxu0 0.0
  %972 = vmatpush1.msra.mxu0 %v958
  %973 = vmatprep.subr.mxu0 0.0
  %974 = vmatpush1.msra.mxu0 %v959
  %975 = vmatprep.subr.mxu0 0.0
  %976 = vmatpush1.msra.mxu0 0.0
  %977 = vmatprep.subr.mxu0 0.0
  %978 = vmatpush1.msra.mxu0 0.0
  %979 = vmatprep.subr.mxu0 0.0
  %980 = vmatpush1.msra.mxu0 0.0
  %981 = vmatprep.subr.mxu0 0.0
  %982 = vmatpush1.msra.mxu0 0.0
  %983 = vmatprep.subr.mxu0 0.0
  %984 = vmatpush1.msra.mxu0 0.0
  %985 = vmatprep.subr.mxu0 0.0
  %986 = vmatpush1.msra.mxu0 0.0
  %987 = vmatprep.subr.mxu0 0.0
  %988 = vmatpush1.msra.mxu0 0.0
  %989 = vmatprep.subr.mxu0 0.0
  %990 = vmatpush1.msra.mxu0 0.0
  %991 = vmatprep.subr.mxu0 0.0
  %992 = vmatpush1.msra.mxu0 0.0
  %993 = vmatprep.subr.mxu0 0.0
  %994 = vmatpush1.msra.mxu0 0.0
  %995 = vmatprep.subr.mxu0 0.0
  %996 = vmatpush1.msra.mxu0 0.0
  %997 = vmatprep.subr.mxu0 0.0
  %998 = vmatpush1.msra.mxu0 0.0
  %999 = vmatprep.subr.mxu0 0.0
  %1000 = vmatpush1.msra.mxu0 0.0
  %1001 = vmatprep.subr.mxu0 0.0
  %1002 = vmatpush1.msra.mxu0 0.0
  %1003 = vmatprep.subr.mxu0 0.0
  %1004 = vmatpush1.msra.mxu0 0.0
  %1005 = vmatprep.subr.mxu0 0.0
  %1006 = vmatpush1.msra.mxu0 0.0
  %1007 = vmatprep.subr.mxu0 0.0
  %1008 = vmatpush1.msra.mxu0 0.0
  %1009 = vmatprep.subr.mxu0 0.0
  %1010 = vmatpush1.msra.mxu0 0.0
  %1011 = vmatprep.subr.mxu0 0.0
  %1012 = vmatpush1.msra.mxu0 0.0
  %1013 = vmatprep.subr.mxu0 0.0
  %1014 = vmatpush1.msra.mxu0 0.0
  %1015 = vmatprep.subr.mxu0 0.0
  %1016 = vmatpush1.msra.mxu0 0.0
  %1017 = vmatprep.subr.mxu0 0.0
  %1018 = vmatpush1.msra.mxu0 0.0
  %1019 = vmatprep.subr.mxu0 0.0
  %1020 = vmatpush1.msra.mxu0 0.0
  %1021 = vmatprep.subr.mxu0 0.0
  %1022 = vmatpush1.msra.mxu0 0.0
  %1023 = vmatprep.subr.mxu0 0.0
  %1024 = vmatpush1.msra.mxu0 0.0
  %1025 = vmatprep.subr.mxu0 0.0
  %1026 = vmatpush1.msra.mxu0 0.0
  %1027 = vmatprep.subr.mxu0 0.0
  %1028 = vmatpush1.msra.mxu0 0.0
  %1029 = vmatprep.subr.mxu0 0.0
  %1030 = vmatpush1.msra.mxu0 0.0
  %1031 = vmatprep.mubr.f32.mxu0 0.0
  %1032 = vmatmul.mubr.f32.gmra.mrb[0].mxu0 %v962
  %v1033 = vpop.f32.mrb[0].mxu0
  %v1034 = vadd.f32 0.0, %v1033
  %v1035 = vpop.f32.mrb[0].mxu0
  %1036 = vmatprep.mubr.f32.mxu0 0.0
  %1037 = vmatmul.mubr.f32.gmra.mrb[0].mxu0 %v965
  %v1038 = vpop.f32.mrb[0].mxu0
  %v1039 = vadd.f32 0.0, %v1038
  %v1040 = vpop.f32.mrb[0].mxu0
  %1041 = vdwg.mxu0
  %v1042 = vlaneseq
  %v1043 = vshrl.u32 %v1042, 7
  %v1044 = vsub.s32 0, %v1043
  %v1045 = vrot.slane %v960, %v1044
  %v1047 = vsel %vm204, %v16, 0
  %1049 = vmatprep.subr.mxu0 0.0
  %1050 = vmatpush1.msra.mxu0 %v1034
  %1051 = vmatprep.subr.mxu0 0.0
  %1052 = vmatpush1.msra.mxu0 %v1039
  %1053 = vmatprep.subr.mxu0 0.0
  %1054 = vmatpush1.msra.mxu0 0.0
  %1055 = vmatprep.subr.mxu0 0.0
  %1056 = vmatpush1.msra.mxu0 0.0
  %1057 = vmatprep.subr.mxu0 0.0
  %1058 = vmatpush1.msra.mxu0 0.0
  %1059 = vmatprep.subr.mxu0 0.0
  %1060 = vmatpush1.msra.mxu0 0.0
  %1061 = vmatprep.subr.mxu0 0.0
  %1062 = vmatpush1.msra.mxu0 0.0
  %1063 = vmatprep.subr.mxu0 0.0
  %1064 = vmatpush1.msra.mxu0 0.0
  %1065 = vmatprep.subr.mxu0 0.0
  %1066 = vmatpush1.msra.mxu0 0.0
  %1067 = vmatprep.subr.mxu0 0.0
  %1068 = vmatpush1.msra.mxu0 0.0
  %1069 = vmatprep.subr.mxu0 0.0
  %1070 = vmatpush1.msra.mxu0 0.0
  %1071 = vmatprep.subr.mxu0 0.0
  %1072 = vmatpush1.msra.mxu0 0.0
  %1073 = vmatprep.subr.mxu0 0.0
  %1074 = vmatpush1.msra.mxu0 0.0
  %1075 = vmatprep.subr.mxu0 0.0
  %1076 = vmatpush1.msra.mxu0 0.0
  %1077 = vmatprep.subr.mxu0 0.0
  %1078 = vmatpush1.msra.mxu0 0.0
  %1079 = vmatprep.subr.mxu0 0.0
  %1080 = vmatpush1.msra.mxu0 0.0
  %1081 = vmatprep.subr.mxu0 0.0
  %1082 = vmatpush1.msra.mxu0 0.0
  %1083 = vmatprep.subr.mxu0 0.0
  %1084 = vmatpush1.msra.mxu0 0.0
  %1085 = vmatprep.subr.mxu0 0.0
  %1086 = vmatpush1.msra.mxu0 0.0
  %1087 = vmatprep.subr.mxu0 0.0
  %1088 = vmatpush1.msra.mxu0 0.0
  %1089 = vmatprep.subr.mxu0 0.0
  %1090 = vmatpush1.msra.mxu0 0.0
  %1091 = vmatprep.subr.mxu0 0.0
  %1092 = vmatpush1.msra.mxu0 0.0
  %1093 = vmatprep.subr.mxu0 0.0
  %1094 = vmatpush1.msra.mxu0 0.0
  %1095 = vmatprep.subr.mxu0 0.0
  %1096 = vmatpush1.msra.mxu0 0.0
  %1097 = vmatprep.subr.mxu0 0.0
  %1098 = vmatpush1.msra.mxu0 0.0
  %1099 = vmatprep.subr.mxu0 0.0
  %1100 = vmatpush1.msra.mxu0 0.0
  %1101 = vmatprep.subr.mxu0 0.0
  %1102 = vmatpush1.msra.mxu0 0.0
  %1103 = vmatprep.subr.mxu0 0.0
  %1104 = vmatpush1.msra.mxu0 0.0
  %1105 = vmatprep.subr.mxu0 0.0
  %1106 = vmatpush1.msra.mxu0 0.0
  %1107 = vmatprep.subr.mxu0 0.0
  %1108 = vmatpush1.msra.mxu0 0.0
  %1109 = vmatprep.subr.mxu0 0.0
  %1110 = vmatpush1.msra.mxu0 0.0
  %1111 = vmatprep.subr.mxu0 0.0
  %1112 = vmatpush1.msra.mxu0 0.0
  %1113 = vmatprep.mubr.f32.mxu0 0.0
  %1114 = vmatmul.mubr.f32.gmra.mrb[0].mxu0 %v1047
  %v1115 = vpop.f32.mrb[0].mxu0
  %v1116 = vadd.f32 %v1045, %v1115
  %v1117 = vpop.f32.mrb[0].mxu0
  %1118 = vdwg.mxu0
  %v1119 = vmax.f32 %v1116, 0.0
  %v1120 = vld [vmem:[%s2 + $0x100] sm:$0x1]
  %v1121 = vld [vmem:[%s2 + $0x108] sm:$0x1]
  %v1122 = vlaneseq
  %v1123 = vshrl.u32 %v1122, 7
  %v1124 = vsub.s32 0, %v1123
  %v1125 = vrot.slane %v1120, %v1124
  %v1126 = vmul.f32 %v1119, %v1125
  %vm1127 = vcmask 257024
  %v1128 = vsel %vm1127, %v1126, 0.0
  %1129 = vadd.xlane.f32.xlu0 %v1128
  %v1130 = vpop.xlane.xlu0 %1129
  %v1131 = vlaneseq
  %v1132 = vshrl.u32 %v1131, 7
  %v1133 = vsub.s32 0, %v1132
  %v1134 = vrot.slane %v1121, %v1133
  %v1135 = vadd.f32 %v1130, %v1134
  %vm1136 = vcmask 3072
  %1137 = vst.msk [vmem:[%s3] sm:$0xf] %vm1136, %v1135
  // Predicated region
  $region14: #{net_forward.1} parent=0 // pred_check
    _
  $region15: #{net_forward.1} parent=0 // pred_check_branch
    %1139 = sbr.rel (0) target = $region17
  $region16: #{net_forward.1} parent=0 // pred_region
    _
  $region17: #{net_forward.1} parent=0 // pred_fallthru
    _
  // Predicated region
  $region18: #{net_forward.1} parent=0 // pred_check
    _
  $region19: #{net_forward.1} parent=0 // pred_check_branch
    %1141 = sbr.rel (0) target = $region21
  $region20: #{net_forward.1} parent=0 // pred_region
    _
  $region21: #{net_forward.1} parent=0 // pred_fallthru
    _

</llo_original>
